<compile_context>
chip_gen: v5e
topology: v5e:2x2
jax: 0.10.0
libtpu: 0.0.40
codegen_flags: <defaults>
</compile_context>

<pallas_src>
import jax
import jax.numpy as jnp
from jax.experimental import pallas as pl
from jax.experimental.pallas import tpu as pltpu


def ddi_ffn_kernel(f1_ref, f2_ref, w1a_ref, w1b_ref, b1_ref, w2_ref, b2_ref,
                   out_ref):
    # In-kernel cast of the streamed f32 features to bf16 (MXU-native input);
    # rides on the VPU for free while the kernel is HBM-bound.
    f1 = f1_ref[...].astype(w1a_ref.dtype)
    f2 = f2_ref[...].astype(w1b_ref.dtype)

    # fusion_ffn: Linear(2*D -> H) on concat(feat_1, feat_2), decomposed so no
    # concatenation is needed.  f32 accumulation via preferred_element_type.
    fused = (
        jnp.dot(f1, w1a_ref[...], preferred_element_type=jnp.float32)
        + jnp.dot(f2, w1b_ref[...], preferred_element_type=jnp.float32)
        + b1_ref[...]
    )

    # ffn: activation (ReLU) -> dropout (identity in eval) -> Linear(H -> O).
    hidden = jnp.maximum(fused, 0.0)
    logits = (
        jnp.dot(hidden.astype(w2_ref.dtype), w2_ref[...],
                preferred_element_type=jnp.float32)
        + b2_ref[...]
    )

    # classification & eval -> sigmoid.  Narrow (O-lane) epilogue + store.
    out_ref[...] = jax.nn.sigmoid(logits).astype(out_ref.dtype)


def prepare_ddi_params(w1, b1, w2, b2, feat_dim, param_dtype=jnp.bfloat16):
    """One-time parameter prep (hoist out of the per-call forward path).

    w1: (2*D, H), b1: (H,), w2: (H, O), b2: (O,).  Splits the concat-Linear
    weight and casts matmul operands to the MXU-native dtype; biases stay f32.
    """
    D = feat_dim
    w1a = w1[:D, :].astype(param_dtype)            # weights hitting feat_1
    w1b = w1[D:, :].astype(param_dtype)            # weights hitting feat_2
    b1_2d = b1.reshape(1, -1).astype(jnp.float32)
    w2_c = w2.astype(param_dtype)
    b2_2d = b2.reshape(1, -1).astype(jnp.float32)
    return w1a, w1b, b1_2d, w2_c, b2_2d


def ddi_model_forward(feat_1, feat_2, params, *, batch_tile=4096,
                      out_dtype=jnp.float32):
    """feat_1, feat_2: (B, D) float32 encoder outputs.  params from
    prepare_ddi_params.  Returns (B, O) probabilities."""
    w1a, w1b, b1_2d, w2_c, b2_2d = params
    B, D = feat_1.shape
    H = w1a.shape[1]
    O = w2_c.shape[1]

    # --- batch tiling -----------------------------------------------------
    # Sublane granule for f32 tiles is 8.  Cap TB at ~B/2 (rounded up to the
    # granule) so the grid has >= 2 steps whenever B allows it — on v7x the
    # "parallel" axis then shards across both TensorCores.  Large TB amortizes
    # the ~0.35 us per-grid-step overhead; VMEM stays tiny (<~3 MiB at 4096).
    granule = 8
    half = (B + 1) // 2
    half = max(granule, ((half + granule - 1) // granule) * granule)
    TB = max(granule, min(batch_tile, half))
    grid = (pl.cdiv(B, TB),)   # ragged last block handled by Pallas masking

    # Activation tiles stream over the batch axis; parameters stay resident.
    stream = lambda shape: pl.BlockSpec(shape, lambda i: (i, 0))
    resident = lambda shape: pl.BlockSpec(shape, lambda i: (0, 0))

    out = pl.pallas_call(
        ddi_ffn_kernel,
        out_shape=jax.ShapeDtypeStruct((B, O), out_dtype),
        grid=grid,
        in_specs=[
            stream((TB, D)),      # feat_1 tile (f32, cast in-kernel)
            stream((TB, D)),      # feat_2 tile (f32, cast in-kernel)
            resident((D, H)),     # W1[:D]  (bf16, VMEM-resident)
            resident((D, H)),     # W1[D:]  (bf16, VMEM-resident)
            resident((1, H)),     # b1 (f32)
            resident((H, O)),     # W2 (bf16)
            resident((1, O)),     # b2 (f32)
        ],
        out_specs=stream((TB, O)),  # unpadded, lean writeback
        compiler_params=pltpu.CompilerParams(
            dimension_semantics=("parallel",),
        ),
    )(feat_1, feat_2, w1a, w1b, b1_2d, w2_c, b2_2d)

    return out


def _reference(feat_1, feat_2, w1, b1, w2, b2):
    fused = jnp.concatenate([feat_1, feat_2], axis=1) @ w1 + b1
    hidden = jnp.maximum(fused, 0.0)
    logits = hidden @ w2 + b2
    return jax.nn.sigmoid(logits)


if __name__ == "__main__":
    # Small shapes consistent with the module:
    #   hidden_size (encoder output / first_linear_dim) = 32
    #   ffn_hidden_size = 64, output_size (num tasks)   = 16, batch = 8
    B, D, H, O = 8, 32, 64, 16

    key = jax.random.PRNGKey(0)
    k1, k2, k3, k4, k5, k6 = jax.random.split(key, 6)

    feat_1 = jax.random.normal(k1, (B, D), dtype=jnp.float32)
    feat_2 = jax.random.normal(k2, (B, D), dtype=jnp.float32)

    # Deterministic synthetic parameters (fusion Linear(2D->H), head Linear(H->O)).
    w1 = jax.random.normal(k3, (2 * D, H), dtype=jnp.float32) * 0.1
    b1 = jax.random.normal(k4, (H,), dtype=jnp.float32) * 0.1
    w2 = jax.random.normal(k5, (H, O), dtype=jnp.float32) * 0.1
    b2 = jax.random.normal(k6, (O,), dtype=jnp.float32) * 0.1

    params = prepare_ddi_params(w1, b1, w2, b2, feat_dim=D)
    out = ddi_model_forward(feat_1, feat_2, params)
    jax.block_until_ready(out)

    ref = _reference(feat_1, feat_2, w1, b1, w2, b2)
    assert out.shape == (B, O)
    # bf16 matmul operands -> loosened tolerance vs the f32 reference.
    assert jnp.allclose(out, ref, atol=1e-2, rtol=1e-2), (
        float(jnp.max(jnp.abs(out - ref))))

    print("KERNEL_OK")
</pallas_src>

<mosaic_0001>
module attributes {stable_mosaic.version = 11 : i64} {
  func.func @ddi_ffn_kernel(%arg0: i32, %arg1: memref<8x32xf32, #tpu.memory_space<vmem>>, %arg2: memref<8x32xf32, #tpu.memory_space<vmem>>, %arg3: memref<32x64xbf16, #tpu.memory_space<vmem>>, %arg4: memref<32x64xbf16, #tpu.memory_space<vmem>>, %arg5: memref<1x64xf32, #tpu.memory_space<vmem>>, %arg6: memref<64x16xbf16, #tpu.memory_space<vmem>>, %arg7: memref<1x16xf32, #tpu.memory_space<vmem>>, %arg8: memref<8x16xf32, #tpu.memory_space<vmem>>) attributes {dimension_semantics = [#tpu.dimension_semantics<parallel>], iteration_bounds = array<i64: 1>, scalar_prefetch = 0 : i64, scratch_operands = 0 : i64, tpu.core_type = #tpu.core_type<tc>, window_params = [{transform_indices = @transform_0, window_bounds = array<i64: 8, 32>}, {transform_indices = @transform_1, window_bounds = array<i64: 8, 32>}, {pipeline_mode = #tpu.pipeline_mode<synchronous>, transform_indices = @transform_2, window_bounds = array<i64: 32, 64>}, {pipeline_mode = #tpu.pipeline_mode<synchronous>, transform_indices = @transform_3, window_bounds = array<i64: 32, 64>}, {pipeline_mode = #tpu.pipeline_mode<synchronous>, transform_indices = @transform_4, window_bounds = array<i64: 1, 64>}, {pipeline_mode = #tpu.pipeline_mode<synchronous>, transform_indices = @transform_5, window_bounds = array<i64: 64, 16>}, {pipeline_mode = #tpu.pipeline_mode<synchronous>, transform_indices = @transform_6, window_bounds = array<i64: 1, 16>}, {transform_indices = @transform_7, window_bounds = array<i64: 8, 16>}]} {
    %c0 = arith.constant 0 : index
    %c0_0 = arith.constant 0 : index
    %0 = vector.load %arg1[%c0, %c0_0] : memref<8x32xf32, #tpu.memory_space<vmem>>, vector<8x32xf32>
    %1 = arith.truncf %0 : vector<8x32xf32> to vector<8x32xbf16>
    %c0_1 = arith.constant 0 : index
    %c0_2 = arith.constant 0 : index
    %2 = vector.load %arg2[%c0_1, %c0_2] : memref<8x32xf32, #tpu.memory_space<vmem>>, vector<8x32xf32>
    %3 = arith.truncf %2 : vector<8x32xf32> to vector<8x32xbf16>
    %c0_3 = arith.constant 0 : index
    %c0_4 = arith.constant 0 : index
    %4 = vector.load %arg3[%c0_3, %c0_4] : memref<32x64xbf16, #tpu.memory_space<vmem>>, vector<32x64xbf16>
    %cst = arith.constant dense<0.000000e+00> : vector<8x64xf32>
    %5 = tpu.matmul %1, %4, %cst {dimension_numbers = #tpu.dot_dimension_numbers<[1], [0], [0], [1], [0, 0, 1, 1], [], []>} : vector<8x32xbf16>, vector<32x64xbf16>, vector<8x64xf32> -> vector<8x64xf32>
    %c0_5 = arith.constant 0 : index
    %c0_6 = arith.constant 0 : index
    %6 = vector.load %arg4[%c0_5, %c0_6] : memref<32x64xbf16, #tpu.memory_space<vmem>>, vector<32x64xbf16>
    %cst_7 = arith.constant dense<0.000000e+00> : vector<8x64xf32>
    %7 = tpu.matmul %3, %6, %cst_7 {dimension_numbers = #tpu.dot_dimension_numbers<[1], [0], [0], [1], [0, 0, 1, 1], [], []>} : vector<8x32xbf16>, vector<32x64xbf16>, vector<8x64xf32> -> vector<8x64xf32>
    %8 = arith.addf %5, %7 : vector<8x64xf32>
    %c0_8 = arith.constant 0 : index
    %c0_9 = arith.constant 0 : index
    %9 = vector.load %arg5[%c0_8, %c0_9] : memref<1x64xf32, #tpu.memory_space<vmem>>, vector<1x64xf32>
    %10 = vector.broadcast %9 : vector<1x64xf32> to vector<8x64xf32>
    %11 = arith.addf %8, %10 : vector<8x64xf32>
    %cst_10 = arith.constant 0.000000e+00 : f32
    %12 = vector.broadcast %cst_10 : f32 to vector<8x64xf32>
    %13 = arith.maximumf %11, %12 : vector<8x64xf32>
    %14 = arith.truncf %13 : vector<8x64xf32> to vector<8x64xbf16>
    %c0_11 = arith.constant 0 : index
    %c0_12 = arith.constant 0 : index
    %15 = vector.load %arg6[%c0_11, %c0_12] : memref<64x16xbf16, #tpu.memory_space<vmem>>, vector<64x16xbf16>
    %cst_13 = arith.constant dense<0.000000e+00> : vector<8x16xf32>
    %16 = tpu.matmul %14, %15, %cst_13 {dimension_numbers = #tpu.dot_dimension_numbers<[1], [0], [0], [1], [0, 0, 1, 1], [], []>} : vector<8x64xbf16>, vector<64x16xbf16>, vector<8x16xf32> -> vector<8x16xf32>
    %c0_14 = arith.constant 0 : index
    %c0_15 = arith.constant 0 : index
    %17 = vector.load %arg7[%c0_14, %c0_15] : memref<1x16xf32, #tpu.memory_space<vmem>>, vector<1x16xf32>
    %18 = vector.broadcast %17 : vector<1x16xf32> to vector<8x16xf32>
    %19 = arith.addf %16, %18 : vector<8x16xf32>
    %20 = arith.negf %19 : vector<8x16xf32>
    %21 = math.exp %20 : vector<8x16xf32>
    %cst_16 = arith.constant 1.000000e+00 : f32
    %22 = vector.broadcast %cst_16 : f32 to vector<8x16xf32>
    %23 = arith.addf %22, %21 : vector<8x16xf32>
    %24 = arith.divf %22, %23 : vector<8x16xf32>
    %c0_17 = arith.constant 0 : index
    %c0_18 = arith.constant 0 : index
    %25 = vector.load %arg8[%c0_17, %c0_18] : memref<8x16xf32, #tpu.memory_space<vmem>>, vector<8x16xf32>
    tpu.vector_store %arg8[%c0_17, %c0_18], %24 {strides = array<i32>} : memref<8x16xf32, #tpu.memory_space<vmem>>, vector<8x16xf32>,
    return
  }
  func.func @transform_0(%arg0: i32) -> (i32, i32) {
    %c0_i32 = arith.constant 0 : i32
    %c0_i32_0 = arith.constant 0 : i32
    return %arg0, %c0_i32 : i32, i32
  }
  func.func @transform_1(%arg0: i32) -> (i32, i32) {
    %c0_i32 = arith.constant 0 : i32
    %c0_i32_0 = arith.constant 0 : i32
    return %arg0, %c0_i32 : i32, i32
  }
  func.func @transform_2(%arg0: i32) -> (i32, i32) {
    %c0_i32 = arith.constant 0 : i32
    %c0_i32_0 = arith.constant 0 : i32
    %c0_i32_1 = arith.constant 0 : i32
    return %c0_i32, %c0_i32_0 : i32, i32
  }
  func.func @transform_3(%arg0: i32) -> (i32, i32) {
    %c0_i32 = arith.constant 0 : i32
    %c0_i32_0 = arith.constant 0 : i32
    %c0_i32_1 = arith.constant 0 : i32
    return %c0_i32, %c0_i32_0 : i32, i32
  }
  func.func @transform_4(%arg0: i32) -> (i32, i32) {
    %c0_i32 = arith.constant 0 : i32
    %c0_i32_0 = arith.constant 0 : i32
    %c0_i32_1 = arith.constant 0 : i32
    return %c0_i32, %c0_i32_0 : i32, i32
  }
  func.func @transform_5(%arg0: i32) -> (i32, i32) {
    %c0_i32 = arith.constant 0 : i32
    %c0_i32_0 = arith.constant 0 : i32
    %c0_i32_1 = arith.constant 0 : i32
    return %c0_i32, %c0_i32_0 : i32, i32
  }
  func.func @transform_6(%arg0: i32) -> (i32, i32) {
    %c0_i32 = arith.constant 0 : i32
    %c0_i32_0 = arith.constant 0 : i32
    %c0_i32_1 = arith.constant 0 : i32
    return %c0_i32, %c0_i32_0 : i32, i32
  }
  func.func @transform_7(%arg0: i32) -> (i32, i32) {
    %c0_i32 = arith.constant 0 : i32
    %c0_i32_0 = arith.constant 0 : i32
    return %arg0, %c0_i32 : i32, i32
  }
}

</mosaic_0001>

<llo_original>
// kernel: tpu_custom_call.1
$region0: #{tpu_custom_call.1}
  #allocation0 [shape = 'u32[]', space=smem, size = 0x4, offset = 0x4, fixed_abs, tag = 'smem constant byte address 0x4 - core index']
  #allocation1 [shape = 'u32[72,128]{1,0:T(1,128)}', space=vmem, size = 0x9000, scoped, tag = 'internal scratch']
  %s0 = inlined_call_operand.vmem [shape: f32[8,32], index: 0, kind: input, shape index: {}]
  %s1 = inlined_call_operand.hbm [shape: f32[8,32], index: 1, kind: input, shape index: {}]
  %s2 = inlined_call_operand.vmem [shape: bf16[32,64], index: 2, kind: input, shape index: {}]
  %s3 = inlined_call_operand.vmem [shape: bf16[32,64], index: 3, kind: input, shape index: {}]
  %s4 = inlined_call_operand.vmem [shape: f32[1,64], index: 4, kind: input, shape index: {}]
  %s5 = inlined_call_operand.vmem [shape: bf16[64,16], index: 5, kind: input, shape index: {}]
  %s6 = inlined_call_operand.vmem [shape: f32[1,16], index: 6, kind: input, shape index: {}]
  %s7 = inlined_call_operand.hbm [shape: f32[8,16], index: 7, kind: output, shape index: {}]
  %s8 = sld [smem:[#allocation0]]
  $region42: #{tpu_custom_call.1} parent=0
    _
  %s10 = ssub.s32 1, %s8
  %s11 = scalar_select 0, %s10, %s8
  $region1: #{tpu_custom_call.1} parent=0
    #allocation2 [shape = 'u8[4096]{0}', space=vmem, size = 0x1000, scoped, tag = 'input window, operand 1, single buffered']
    #allocation3 [shape = 's32[1]{0}', space=sflag, size = 0x4, scoped, tag = 'scoped memory for tpu_custom_call.1']
    #allocation4 [shape = 's32[1]{0}', space=sflag, size = 0x4, scoped, tag = 'scoped memory for tpu_custom_call.1']
    #allocation5 [shape = 'u8[4096]{0}', space=vmem, size = 0x1000, scoped, tag = 'output window, operand 0, single buffered']
    %12 = vsyncpa [#allocation3], 0
    %13 = vsyncpa [#allocation4], 0
    // Predicated region
    $region2: #{tpu_custom_call.1} parent=1 // pred_check
      _
    $region3: #{tpu_custom_call.1} parent=1 // pred_check_branch
      %15 = sbr.rel (0) target = $region5
    $region4: #{tpu_custom_call.1} parent=1 // pred_region
      _
    $region5: #{tpu_custom_call.1} parent=1 // pred_fallthru
      _
    // Predicated region
    $region6: #{tpu_custom_call.1} parent=1 // pred_check
      _
    $region7: #{tpu_custom_call.1} parent=1 // pred_check_branch
      %17 = sbr.rel (0) target = $region9
    $region8: #{tpu_custom_call.1} parent=1 // pred_region
      %19 = vsyncadd [#allocation3], 0
      %s21 = sshll.u32 %s1, 4
      %s22 = int_to_ptr.hbm [resolvable:$true] %s21
      %s23 = sshll.u32 [#allocation2], 4
      %s24 = int_to_ptr.vmem [resolvable:$true] %s23
      %26 = dma.hbm_to_vmem [thread:$0]  %s22, 128, %s24, [#allocation3]
    $region9: #{tpu_custom_call.1} parent=1 // pred_fallthru
      _
    // Predicated region
    $region10: #{tpu_custom_call.1} parent=1 // pred_check
      _
    $region11: #{tpu_custom_call.1} parent=1 // pred_check_branch
      %28 = sbr.rel (0) target = $region13
    $region12: #{tpu_custom_call.1} parent=1 // pred_region
      _
    $region13: #{tpu_custom_call.1} parent=1 // pred_fallthru
      _
    // Predicated region
    $region14: #{tpu_custom_call.1} parent=1 // pred_check
      _
    $region15: #{tpu_custom_call.1} parent=1 // pred_check_branch
      %30 = sbr.rel (0) target = $region17
    $region16: #{tpu_custom_call.1} parent=1 // pred_region
      _
    $region17: #{tpu_custom_call.1} parent=1 // pred_fallthru
      _
    // Predicated region
    $region18: #{tpu_custom_call.1} parent=1 // pred_check
      _
    $region19: #{tpu_custom_call.1} parent=1 // pred_check_branch
      %32 = sbr.rel (0) target = $region21
    $region20: #{tpu_custom_call.1} parent=1 // pred_region
      _
    $region21: #{tpu_custom_call.1} parent=1 // pred_fallthru
      _
    // Predicated region
    $region22: #{tpu_custom_call.1} parent=1 // pred_check
      _
    $region23: #{tpu_custom_call.1} parent=1 // pred_check_branch
      %34 = sbr.rel (0) target = $region25
    $region24: #{tpu_custom_call.1} parent=1 // pred_region
      _
    $region25: #{tpu_custom_call.1} parent=1 // pred_fallthru
      _
    // Predicated region
    $region26: #{tpu_custom_call.1} parent=1 // pred_check
      _
    $region27: #{tpu_custom_call.1} parent=1 // pred_check_branch
      %36 = sbr.rel (0) target = $region29
    $region28: #{tpu_custom_call.1} parent=1 // pred_region
      _
    $region29: #{tpu_custom_call.1} parent=1 // pred_fallthru
      _
    // Predicated region
    $region30: #{tpu_custom_call.1} parent=1 // pred_check
      _
    $region31: #{tpu_custom_call.1} parent=1 // pred_check_branch
      %38 = sbr.rel (0) target = $region33
    $region32: #{tpu_custom_call.1} parent=1 // pred_region
      %40 = dma.done [#allocation3], 128
    $region33: #{tpu_custom_call.1} parent=1 // pred_fallthru
      _
    %v42 = vld [vmem:[%s0] sm:$0xff]
    %v43 = vpack.c.bf16 %v42, %v42
    %v44 = vld [vmem:[#allocation2] sm:$0xff]
    %v45 = vpack.c.bf16 %v44, %v44
    %v46 = vld [vmem:[%s2] sm:$0xf]
    %v47 = vld [vmem:[%s2 + $0x4] sm:$0xf]
    %v48 = vld [vmem:[%s2 + $0x8] sm:$0xf]
    %v49 = vld [vmem:[%s2 + $0xc] sm:$0xf]
    %v50 = vld [vmem:[%s3] sm:$0xf]
    %v51 = vld [vmem:[%s3 + $0x4] sm:$0xf]
    %v52 = vld [vmem:[%s3 + $0x8] sm:$0xf]
    %v53 = vld [vmem:[%s3 + $0xc] sm:$0xf]
    %v58 = vunpack.c.l.b16 %v50
    %v59 = vunpack.c.l.b16 %v51
    %v60 = vunpack.c.l.b16 %v52
    %v61 = vunpack.c.l.b16 %v53
    %v62 = vpack.c.b16 %v59, %v58
    %v63 = vpack.c.b16 %v61, %v60
    %vm66 = vcmask 261120
    %v68 = vsel %vm66, %v45, 0
    %70 = vmatpush.bf16.msra.mxu0 0
    %71 = vmatpush.bf16.msra.mxu0 0
    %72 = vmatpush.bf16.msra.mxu0 0
    %73 = vmatpush.bf16.msra.mxu0 0
    %74 = vmatpush.bf16.msra.mxu0 0
    %75 = vmatpush.bf16.msra.mxu0 0
    %76 = vmatpush.bf16.msra.mxu0 %v63
    %77 = vmatpush.bf16.msra.mxu0 %v62
    %78 = vmatmul.bf16.gmra.mxu0 %v68
    %v79 = vpop.f32.mrf.mxu0
    %v80 = vadd.f32 0.0, %v79
    %v81 = vpop.f32.mrf.mxu0
    %82 = vdwg.mxu0
    %v87 = vunpack.c.l.b16 %v46
    %v88 = vunpack.c.l.b16 %v47
    %v89 = vunpack.c.l.b16 %v48
    %v90 = vunpack.c.l.b16 %v49
    %v91 = vpack.c.b16 %v88, %v87
    %v92 = vpack.c.b16 %v90, %v89
    %v96 = vsel %vm66, %v43, 0
    %98 = vmatpush.bf16.msra.mxu0 0
    %99 = vmatpush.bf16.msra.mxu0 0
    %100 = vmatpush.bf16.msra.mxu0 0
    %101 = vmatpush.bf16.msra.mxu0 0
    %102 = vmatpush.bf16.msra.mxu0 0
    %103 = vmatpush.bf16.msra.mxu0 0
    %104 = vmatpush.bf16.msra.mxu0 %v92
    %105 = vmatpush.bf16.msra.mxu0 %v91
    %106 = vmatmul.bf16.gmra.mxu0 %v96
    %v107 = vpop.f32.mrf.mxu0
    %v108 = vadd.f32 %v80, %v107
    %v109 = vpop.f32.mrf.mxu0
    %110 = vdwg.mxu0
    %v111 = vld [vmem:[%s4] sm:$0x1]
    %v113 = vperm.slane %v111, 0
    %v115 = vadd.f32 %v108, %v113
    %v116 = vmax.f32 %v115, 0.0
    %v117 = vpack.c.bf16 %v116, %v116
    %v118 = vld [vmem:[%s5] sm:$0xf]
    %v119 = vld [vmem:[%s5 + $0x4] sm:$0xf]
    %v120 = vld [vmem:[%s5 + $0x8] sm:$0xf]
    %v121 = vld [vmem:[%s5 + $0xc] sm:$0xf]
    %v122 = vld [vmem:[%s5 + $0x10] sm:$0xf]
    %v123 = vld [vmem:[%s5 + $0x14] sm:$0xf]
    %v124 = vld [vmem:[%s5 + $0x18] sm:$0xf]
    %v125 = vld [vmem:[%s5 + $0x1c] sm:$0xf]
    %v126 = vld [vmem:[%s6] sm:$0x1]
    %v128 = vperm.slane %v126, 0
    %v138 = vunpack.c.l.b16 %v118
    %v139 = vunpack.c.l.b16 %v119
    %v140 = vunpack.c.l.b16 %v120
    %v141 = vunpack.c.l.b16 %v121
    %v142 = vunpack.c.l.b16 %v122
    %v143 = vunpack.c.l.b16 %v123
    %v144 = vunpack.c.l.b16 %v124
    %v145 = vunpack.c.l.b16 %v125
    %v146 = vpack.c.b16 %v139, %v138
    %v147 = vpack.c.b16 %v141, %v140
    %v148 = vpack.c.b16 %v143, %v142
    %v149 = vpack.c.b16 %v145, %v144
    %vm154 = vcmask 523264
    %v156 = vsel %vm154, %v117, 0
    %158 = vmatpush.bf16.msra.mxu0 0
    %159 = vmatpush.bf16.msra.mxu0 0
    %160 = vmatpush.bf16.msra.mxu0 0
    %161 = vmatpush.bf16.msra.mxu0 0
    %162 = vmatpush.bf16.msra.mxu0 %v149
    %163 = vmatpush.bf16.msra.mxu0 %v148
    %164 = vmatpush.bf16.msra.mxu0 %v147
    %165 = vmatpush.bf16.msra.mxu0 %v146
    %166 = vmatmul.bf16.gmra.mxu0 %v156
    %v167 = vpop.f32.mrf.mxu0
    %v168 = vadd.f32 %v128, %v167
    %v169 = vpop.f32.mrf.mxu0
    %170 = vdwg.mxu0
    %v171 = vxor.u32 %v168, 2147483648
    %v172 = vmul.f32 %v171, 1.442695
    %v173 = vpow.pop %v172
    %v174 = vadd.f32 %v173, 1.0
    %v175 = vrcp.pop %v174
    %v176 = vmul.f32 %v174, %v175
    %v177 = vsub.f32 1.0, %v176
    %v178 = vmul.f32 %v175, %v177
    %v179 = vadd.f32 %v175, %v178
    %vm180 = vweird.f32 %v174
    %vm181 = vweird.f32 %v175
    %vm182 = vmor %vm180, %vm181
    %v183 = vsel %vm182, %v175, %v179
    %v184 = vand.u32 2147483647, %v174
    %vm185 = vcmp.eq.f32.partialorder %v184, 8.507059e+37
    %v186 = vand.u32 %v174, 2147483648
    %v187 = vor.u32 1.1754944e-38, %v186
    %v188 = vsel %vm185, %v187, %v183
    %v189 = vmul.f32 1.0, %v188
    %vm190 = vcmask 130048
    %191 = vst.msk [vmem:[#allocation5] sm:$0xff] %vm190, %v189
    // Predicated region
    $region34: #{tpu_custom_call.1} parent=1 // pred_check
      _
    $region35: #{tpu_custom_call.1} parent=1 // pred_check_branch
      %193 = sbr.rel (0) target = $region37
    $region36: #{tpu_custom_call.1} parent=1 // pred_region
      %195 = vsyncadd [#allocation4], 0
      %s197 = sshll.u32 [#allocation5], 4
      %s198 = int_to_ptr.vmem [resolvable:$true] %s197
      %s199 = sshll.u32 %s7, 4
      %s200 = int_to_ptr.hbm [resolvable:$true] %s199
      %202 = dma.vmem_to_hbm [thread:$0]  %s198, 128, %s200, [#allocation4]
    $region37: #{tpu_custom_call.1} parent=1 // pred_fallthru
      _
    // Predicated region
    $region38: #{tpu_custom_call.1} parent=1 // pred_check
      _
    $region39: #{tpu_custom_call.1} parent=1 // pred_check_branch
      %204 = sbr.rel (0) target = $region41
    $region40: #{tpu_custom_call.1} parent=1 // pred_region
      %206 = dma.done [#allocation4], 128
    $region41: #{tpu_custom_call.1} parent=1 // pred_fallthru
      _
    %207 = vsyncpa [#allocation3], 1
    %208 = vsyncpa [#allocation4], 1

</llo_original>
